<compile_context>
chip_gen: v6e
topology: v6e:2x2x1
jax: 0.10.0
libtpu: 0.0.40
codegen_flags: <defaults>
</compile_context>

<pallas_src>
import functools

import jax
import jax.numpy as jnp
from jax.experimental import pallas as pl
from jax.experimental.pallas import tpu as pltpu

DELTA = 1.0
COEFF = 0.01
EPS = 1e-9

_SAMPLE_ALIGN = 256   # 8 rows x 32 samples: keeps both block layouts sublane-aligned
_CHUNK_ROWS = 1024    # in-kernel compute chunk (bounds live VMEM temporaries)


def _tpu_defaults():
    """(num_splits, block_rows) defaults per TPU generation."""
    kind = ""
    try:
        kind = jax.devices()[0].device_kind.lower()
    except Exception:
        pass
    num_splits = 2 if "v7" in kind else 1          # v7x: 2 TensorCores per chip
    if "v7" in kind or "v6" in kind:
        block_rows = 8192                          # ~5 MiB of useful bytes / grid step
    else:                                          # v5e / unknown: keep steps smaller
        block_rows = 4096
    return num_splits, block_rows


def _evid_huber_nll_kernel(logits_ref, y_ref, out_ref, *, valid, block_rows,
                           chunk_rows, tiles_per_split):
    """Accumulates per-lane partial loss sums for one batch block.

    logits_ref: (block_rows, 128) raw [gamma,nu,alpha,beta] lane interleave
                (32 samples per row, sample-major).
    y_ref:      (block_rows, 32)  y_true, the same 32 samples per row.
    out_ref:    (1, 8, 32) f32 per-lane partial sums, resident across the
                batch-tile ("arbitrary") grid axis.
    """
    split = pl.program_id(0)
    step = pl.program_id(1)

    @pl.when(step == 0)
    def _():
        out_ref[...] = jnp.zeros_like(out_ref)

    # First (unclamped) sample id covered by this grid step.  When the clamped
    # index_map re-reads the last block (odd block counts / extra split), this
    # base is >= `valid`, so the whole step masks to zero below.
    base = (split * tiles_per_split + step) * (block_rows * 32)

    # Exact 0/1 de-interleave matrix: out lanes [0,32) <- gamma (src lane 4k),
    # [32,64) <- nu (4k+1), [64,96) <- beta (4k+3); alpha never leaves the vregs.
    src = jax.lax.broadcasted_iota(jnp.int32, (128, 128), 0)
    dst = jax.lax.broadcasted_iota(jnp.int32, (128, 128), 1)
    is_g = (dst < 32) & (src == 4 * dst)
    is_n = (dst >= 32) & (dst < 64) & (src == 4 * (dst - 32) + 1)
    is_b = (dst >= 64) & (dst < 96) & (src == 4 * (dst - 64) + 3)
    deint = (is_g | is_n | is_b).astype(jnp.float32)

    row_iota = jax.lax.broadcasted_iota(jnp.int32, (chunk_rows, 32), 0)
    lane_iota = jax.lax.broadcasted_iota(jnp.int32, (chunk_rows, 32), 1)

    # Fixed-size row chunks keep live intermediates bounded even for 8192-row
    # DMA blocks (avoids VMEM temps / spills on large tiles).
    @pl.loop(0, block_rows // chunk_rows)
    def _chunk(t):
        r0 = pl.multiple_of(t * chunk_rows, chunk_rows)
        lgt = logits_ref[pl.ds(r0, chunk_rows), :].astype(jnp.float32)  # (C,128)
        y = y_ref[pl.ds(r0, chunk_rows), :].astype(jnp.float32)         # (C,32)

        # MXU is otherwise idle; 0/1 weights make the de-interleave exact.
        packed = jnp.dot(lgt, deint, preferred_element_type=jnp.float32,
                         precision=jax.lax.Precision.HIGHEST)           # (C,128)
        gamma = packed[:, 0:32]
        nu = packed[:, 32:64]
        beta = packed[:, 64:96]

        diff = gamma - y
        absd = jnp.abs(diff)
        huber = jnp.where(absd <= DELTA, 0.5 * diff * diff,
                          DELTA * (absd - 0.5 * DELTA))

        # var = beta / (nu + eps); one exact EUP reciprocal instead of two divides:
        #   inv_var = (nu + eps) * (1/beta);  log(var) = -log(inv_var)
        inv_var = (nu + EPS) * pl.reciprocal(beta, approx=False)
        loss = (1.0 + COEFF * nu) * huber * inv_var - jnp.log(inv_var)

        # Mask padded / out-of-range samples (replaces the old neutral-padding
        # trick that relied on eps underflowing in f32).
        sample = base + 32 * (r0 + row_iota) + lane_iota
        loss = jnp.where(sample < valid, loss, 0.0)

        # Per-lane partial sums (pure vreg adds); cross-lane reduce is done once
        # in the wrapper.
        out_ref[...] += loss.reshape(chunk_rows // 8, 8, 32).sum(axis=0).reshape(1, 8, 32)


def evidential_huber_nll(logits, y_true, *, block_rows=None, num_splits=None):
    """logits: (B, 4) [gamma, nu, alpha, beta]; y_true: (B, 1) -> scalar f32 mean loss."""
    batch = logits.shape[0]
    d_splits, d_rows = _tpu_defaults()
    num_splits = d_splits if num_splits is None else num_splits
    block_rows = d_rows if block_rows is None else block_rows

    # No per-column relayout and no dtype cast here: both inputs reach the kernel
    # via free reshapes of their natural contiguous layouts (bf16 stays bf16 over
    # HBM and is upcast after the DMA).
    # TODO(synk): if the producer can emit gamma/nu/beta/y pre-split (or (4,B)),
    # the in-kernel de-interleave matmul disappears as well.
    flat_logits = jnp.reshape(logits, (-1,))     # (4B,) [g,n,a,b, g,n,a,b, ...]
    flat_y = jnp.reshape(y_true, (-1,))          # (B,)

    padded = -(-batch // _SAMPLE_ALIGN) * _SAMPLE_ALIGN
    pad = padded - batch
    if pad:
        # Only batches that are not a multiple of 256 pay this small copy; the
        # pad region is excluded via in-kernel masking (its values are irrelevant).
        flat_logits = jnp.pad(flat_logits, (0, 4 * pad))
        flat_y = jnp.pad(flat_y, (0, pad))

    rows = padded // 32                          # 32 samples per row in both views
    logits2d = jnp.reshape(flat_logits, (rows, 128))
    y2d = jnp.reshape(flat_y, (rows, 32))

    block_rows = max(8, min(int(block_rows), rows))
    block_rows -= block_rows % 8
    chunk_rows = min(_CHUNK_ROWS, block_rows)
    if block_rows > chunk_rows:
        block_rows -= block_rows % chunk_rows

    total_blocks = -(-rows // block_rows)
    num_splits = max(1, min(int(num_splits), total_blocks))
    tiles_per_split = -(-total_blocks // num_splits)

    def block_index(split, step):
        # Clamp so no DMA ever starts past the array; over-hanging steps are
        # fully masked inside the kernel via their (unclamped) sample base.
        return (jnp.minimum(split * tiles_per_split + step, total_blocks - 1), 0)

    kernel = functools.partial(
        _evid_huber_nll_kernel, valid=batch, block_rows=block_rows,
        chunk_rows=chunk_rows, tiles_per_split=tiles_per_split)

    partials = pl.pallas_call(
        kernel,
        out_shape=jax.ShapeDtypeStruct((num_splits, 8, 32), jnp.float32),
        grid=(num_splits, tiles_per_split),
        in_specs=[pl.BlockSpec((block_rows, 128), block_index),
                  pl.BlockSpec((block_rows, 32), block_index)],
        out_specs=pl.BlockSpec((1, 8, 32), lambda split, step: (split, 0, 0)),
        compiler_params=pltpu.CompilerParams(
            # TODO(synk): on v7x, verify with xprof that the leading "parallel"
            # axis engages both TensorCores; switch to pltpu.CORE_PARALLEL if not.
            dimension_semantics=("parallel", "arbitrary"),
            vmem_limit_bytes=48 * 1024 * 1024),
    )(logits2d, y2d)

    # TODO(synk): forward-only; training use would want a custom VJP / bwd kernel.
    return jnp.sum(partials) / batch


def _reference(logits, y_true):
    logits = logits.astype(jnp.float32)
    y_true = y_true.astype(jnp.float32)
    gamma = logits[:, 0:1]
    nu = logits[:, 1:2]
    beta = logits[:, 3:4]
    diff = gamma - y_true
    absd = jnp.abs(diff)
    huber = jnp.where(absd <= DELTA, 0.5 * diff * diff, DELTA * (absd - 0.5 * DELTA))
    var = beta / (nu + EPS)
    loss = jnp.log(var) + (1.0 + COEFF * nu) * huber / var
    return jnp.mean(loss)


if __name__ == "__main__":
    key = jax.random.PRNGKey(0)

    def make_inputs(k, b):
        k1, k2 = jax.random.split(k)
        raw = jax.random.normal(k1, (b, 4), dtype=jnp.float32)
        # Evidential heads produce positive nu, alpha, beta: softplus + offset so
        # log(var) / reciprocals are well defined.
        gamma_col = raw[:, 0:1]
        pos_cols = jax.nn.softplus(raw[:, 1:4]) + 0.1
        logits = jnp.concatenate([gamma_col, pos_cols], axis=1)        # (b, 4)
        y_true = jax.random.normal(k2, (b, 1), dtype=jnp.float32)      # (b, 1)
        return logits, y_true

    k1, k2, k3 = jax.random.split(key, 3)
    cases = [
        (make_inputs(k1, 8), {}),                    # tiny batch, heavily masked block
        (make_inputs(k2, 512), {}),                  # exact multiple of 256, no pad
        (make_inputs(k3, 1000), {"block_rows": 8}),  # non-multiple batch + multi-block accumulation
    ]
    for (logits, y_true), kwargs in cases:
        out = jax.block_until_ready(evidential_huber_nll(logits, y_true, **kwargs))
        ref = _reference(logits, y_true)
        assert jnp.allclose(out, ref, rtol=1e-5, atol=1e-5), (logits.shape, out, ref)
    print("KERNEL_OK")
</pallas_src>

<mosaic_0001>
module attributes {stable_mosaic.version = 11 : i64} {
  func.func @_evid_huber_nll_kernel(%arg0: i32, %arg1: i32, %arg2: memref<8x128xf32, #tpu.memory_space<vmem>>, %arg3: memref<8x32xf32, #tpu.memory_space<vmem>>, %arg4: memref<1x8x32xf32, #tpu.memory_space<vmem>>) attributes {dimension_semantics = [#tpu.dimension_semantics<parallel>, #tpu.dimension_semantics<arbitrary>], iteration_bounds = array<i64: 1, 1>, scalar_prefetch = 0 : i64, scratch_operands = 0 : i64, tpu.core_type = #tpu.core_type<tc>, window_params = [{transform_indices = @transform_0, window_bounds = array<i64: 8, 128>}, {transform_indices = @transform_1, window_bounds = array<i64: 8, 32>}, {transform_indices = @transform_2, window_bounds = array<i64: 1, 8, 32>}]} {
    %c0_i32 = arith.constant 0 : i32
    %0 = arith.cmpi eq, %arg1, %c0_i32 : i32
    %1 = arith.extui %0 : i1 to i32
    %c0_i32_0 = arith.constant 0 : i32
    %2 = arith.cmpi ne, %1, %c0_i32_0 : i32
    scf.if %2 {
      %cst_30 = arith.constant 0.000000e+00 : f32
      %99 = vector.broadcast %cst_30 : f32 to vector<1x8x32xf32>
      %c0_31 = arith.constant 0 : index
      %c0_32 = arith.constant 0 : index
      %c0_33 = arith.constant 0 : index
      %100 = vector.load %arg4[%c0_31, %c0_32, %c0_33] : memref<1x8x32xf32, #tpu.memory_space<vmem>>, vector<1x8x32xf32>
      tpu.vector_store %arg4[%c0_31, %c0_32, %c0_33], %99 {strides = array<i32>} : memref<1x8x32xf32, #tpu.memory_space<vmem>>, vector<1x8x32xf32>,
    } else {
    }
    %c1_i32 = arith.constant 1 : i32
    %3 = arith.muli %arg0, %c1_i32 : i32
    %4 = arith.addi %3, %arg1 : i32
    %c256_i32 = arith.constant 256 : i32
    %5 = arith.muli %4, %c256_i32 : i32
    %6 = tpu.iota {dimensions = array<i32: 0>} : vector<128x128xi32>
    %7 = tpu.iota {dimensions = array<i32: 1>} : vector<128x128xi32>
    %c32_i32 = arith.constant 32 : i32
    %8 = vector.broadcast %c32_i32 : i32 to vector<128x128xi32>
    %9 = arith.cmpi slt, %7, %8 : vector<128x128xi32>
    %c4_i32 = arith.constant 4 : i32
    %10 = vector.broadcast %c4_i32 : i32 to vector<128x128xi32>
    %11 = arith.muli %10, %7 : vector<128x128xi32>
    %12 = arith.cmpi eq, %6, %11 : vector<128x128xi32>
    %13 = arith.andi %9, %12 : vector<128x128xi1>
    %c32_i32_1 = arith.constant 32 : i32
    %14 = vector.broadcast %c32_i32_1 : i32 to vector<128x128xi32>
    %15 = arith.cmpi sge, %7, %14 : vector<128x128xi32>
    %c64_i32 = arith.constant 64 : i32
    %16 = vector.broadcast %c64_i32 : i32 to vector<128x128xi32>
    %17 = arith.cmpi slt, %7, %16 : vector<128x128xi32>
    %18 = arith.andi %15, %17 : vector<128x128xi1>
    %c32_i32_2 = arith.constant 32 : i32
    %19 = vector.broadcast %c32_i32_2 : i32 to vector<128x128xi32>
    %20 = arith.subi %7, %19 : vector<128x128xi32>
    %c4_i32_3 = arith.constant 4 : i32
    %21 = vector.broadcast %c4_i32_3 : i32 to vector<128x128xi32>
    %22 = arith.muli %21, %20 : vector<128x128xi32>
    %c1_i32_4 = arith.constant 1 : i32
    %23 = vector.broadcast %c1_i32_4 : i32 to vector<128x128xi32>
    %24 = arith.addi %22, %23 : vector<128x128xi32>
    %25 = arith.cmpi eq, %6, %24 : vector<128x128xi32>
    %26 = arith.andi %18, %25 : vector<128x128xi1>
    %c64_i32_5 = arith.constant 64 : i32
    %27 = vector.broadcast %c64_i32_5 : i32 to vector<128x128xi32>
    %28 = arith.cmpi sge, %7, %27 : vector<128x128xi32>
    %c96_i32 = arith.constant 96 : i32
    %29 = vector.broadcast %c96_i32 : i32 to vector<128x128xi32>
    %30 = arith.cmpi slt, %7, %29 : vector<128x128xi32>
    %31 = arith.andi %28, %30 : vector<128x128xi1>
    %c64_i32_6 = arith.constant 64 : i32
    %32 = vector.broadcast %c64_i32_6 : i32 to vector<128x128xi32>
    %33 = arith.subi %7, %32 : vector<128x128xi32>
    %c4_i32_7 = arith.constant 4 : i32
    %34 = vector.broadcast %c4_i32_7 : i32 to vector<128x128xi32>
    %35 = arith.muli %34, %33 : vector<128x128xi32>
    %c3_i32 = arith.constant 3 : i32
    %36 = vector.broadcast %c3_i32 : i32 to vector<128x128xi32>
    %37 = arith.addi %35, %36 : vector<128x128xi32>
    %38 = arith.cmpi eq, %6, %37 : vector<128x128xi32>
    %39 = arith.andi %31, %38 : vector<128x128xi1>
    %40 = arith.ori %13, %26 : vector<128x128xi1>
    %41 = arith.ori %40, %39 : vector<128x128xi1>
    %42 = arith.extui %41 : vector<128x128xi1> to vector<128x128xi32>
    %43 = arith.sitofp %42 : vector<128x128xi32> to vector<128x128xf32>
    %44 = tpu.iota {dimensions = array<i32: 0>} : vector<8x32xi32>
    %45 = tpu.iota {dimensions = array<i32: 1>} : vector<8x32xi32>
    %c0_i32_8 = arith.constant 0 : i32
    %c1_i32_9 = arith.constant 1 : i32
    %46 = arith.muli %c0_i32_8, %c1_i32_9 : i32
    %c0_i32_10 = arith.constant 0 : i32
    %47 = arith.addi %c0_i32_10, %46 : i32
    %c8_i32 = arith.constant 8 : i32
    %48 = arith.muli %47, %c8_i32 : i32
    %49 = tpu.assume_multiple %48, 8 : i32
    %50 = arith.index_cast %49 : i32 to index
    %c0 = arith.constant 0 : index
    %51 = vector.load %arg2[%50, %c0] : memref<8x128xf32, #tpu.memory_space<vmem>>, vector<8x128xf32>
    %52 = arith.index_cast %49 : i32 to index
    %c0_11 = arith.constant 0 : index
    %53 = vector.load %arg3[%52, %c0_11] : memref<8x32xf32, #tpu.memory_space<vmem>>, vector<8x32xf32>
    %cst = arith.constant dense<0.000000e+00> : vector<8x128xf32>
    %54 = tpu.matmul %51, %43, %cst {dimension_numbers = #tpu.dot_dimension_numbers<[1], [0], [0], [1], [0, 0, 1, 1], [], []>, precision = #tpu.contract_precision<fp32>} : vector<8x128xf32>, vector<128x128xf32>, vector<8x128xf32> -> vector<8x128xf32>
    %55 = vector.extract_strided_slice %54 {offsets = [0, 0], sizes = [8, 32], strides = [1, 1]} : vector<8x128xf32> to vector<8x32xf32>
    %56 = vector.extract_strided_slice %54 {offsets = [0, 32], sizes = [8, 32], strides = [1, 1]} : vector<8x128xf32> to vector<8x32xf32>
    %57 = vector.extract_strided_slice %54 {offsets = [0, 64], sizes = [8, 32], strides = [1, 1]} : vector<8x128xf32> to vector<8x32xf32>
    %58 = arith.subf %55, %53 : vector<8x32xf32>
    %59 = math.absf %58 : vector<8x32xf32>
    %cst_12 = arith.constant 1.000000e+00 : f32
    %60 = vector.broadcast %cst_12 : f32 to vector<8x32xf32>
    %61 = arith.cmpf ole, %59, %60 : vector<8x32xf32>
    %cst_13 = arith.constant 5.000000e-01 : f32
    %62 = vector.broadcast %cst_13 : f32 to vector<8x32xf32>
    %63 = arith.mulf %62, %58 : vector<8x32xf32>
    %64 = arith.mulf %63, %58 : vector<8x32xf32>
    %cst_14 = arith.constant 5.000000e-01 : f32
    %65 = vector.broadcast %cst_14 : f32 to vector<8x32xf32>
    %66 = arith.subf %59, %65 : vector<8x32xf32>
    %cst_15 = arith.constant 1.000000e+00 : f32
    %67 = vector.broadcast %cst_15 : f32 to vector<8x32xf32>
    %68 = arith.mulf %67, %66 : vector<8x32xf32>
    %69 = arith.select %61, %64, %68 : vector<8x32xi1>, vector<8x32xf32>
    %cst_16 = arith.constant 9.99999971E-10 : f32
    %70 = vector.broadcast %cst_16 : f32 to vector<8x32xf32>
    %71 = arith.addf %56, %70 : vector<8x32xf32>
    %72 = tpu.reciprocal %57 : vector<8x32xf32> -> vector<8x32xf32>
    %73 = arith.mulf %71, %72 : vector<8x32xf32>
    %cst_17 = arith.constant 0.00999999977 : f32
    %74 = vector.broadcast %cst_17 : f32 to vector<8x32xf32>
    %75 = arith.mulf %74, %56 : vector<8x32xf32>
    %cst_18 = arith.constant 1.000000e+00 : f32
    %76 = vector.broadcast %cst_18 : f32 to vector<8x32xf32>
    %77 = arith.addf %76, %75 : vector<8x32xf32>
    %78 = arith.mulf %77, %69 : vector<8x32xf32>
    %79 = arith.mulf %78, %73 : vector<8x32xf32>
    %80 = math.log %73 : vector<8x32xf32>
    %81 = arith.subf %79, %80 : vector<8x32xf32>
    %82 = vector.broadcast %49 : i32 to vector<8x32xi32>
    %83 = arith.addi %82, %44 : vector<8x32xi32>
    %c32_i32_19 = arith.constant 32 : i32
    %84 = vector.broadcast %c32_i32_19 : i32 to vector<8x32xi32>
    %85 = arith.muli %84, %83 : vector<8x32xi32>
    %86 = vector.broadcast %5 : i32 to vector<8x32xi32>
    %87 = arith.addi %86, %85 : vector<8x32xi32>
    %88 = arith.addi %87, %45 : vector<8x32xi32>
    %c8_i32_20 = arith.constant 8 : i32
    %89 = vector.broadcast %c8_i32_20 : i32 to vector<8x32xi32>
    %90 = arith.cmpi slt, %88, %89 : vector<8x32xi32>
    %cst_21 = arith.constant 0.000000e+00 : f32
    %91 = vector.broadcast %cst_21 : f32 to vector<8x32xf32>
    %92 = arith.select %90, %81, %91 : vector<8x32xi1>, vector<8x32xf32>
    %c0_22 = arith.constant 0 : index
    %c0_23 = arith.constant 0 : index
    %c0_24 = arith.constant 0 : index
    %93 = vector.load %arg4[%c0_22, %c0_23, %c0_24] : memref<1x8x32xf32, #tpu.memory_space<vmem>>, vector<1x8x32xf32>
    %94 = vector.shape_cast %92 : vector<8x32xf32> to vector<1x8x32xf32>
    %cst_25 = arith.constant dense<0.000000e+00> : vector<8x32xf32>
    %95 = vector.multi_reduction <add>, %94, %cst_25 [0] : vector<1x8x32xf32> to vector<8x32xf32>
    %96 = vector.shape_cast %95 : vector<8x32xf32> to vector<1x8x32xf32>
    %97 = arith.addf %93, %96 : vector<1x8x32xf32>
    %c0_26 = arith.constant 0 : index
    %c0_27 = arith.constant 0 : index
    %c0_28 = arith.constant 0 : index
    %98 = vector.load %arg4[%c0_26, %c0_27, %c0_28] : memref<1x8x32xf32, #tpu.memory_space<vmem>>, vector<1x8x32xf32>
    tpu.vector_store %arg4[%c0_26, %c0_27, %c0_28], %97 {strides = array<i32>} : memref<1x8x32xf32, #tpu.memory_space<vmem>>, vector<1x8x32xf32>,
    %c1_i32_29 = arith.constant 1 : i32
    return
  }
  func.func @transform_0(%arg0: i32, %arg1: i32) -> (i32, i32) {
    %c1_i32 = arith.constant 1 : i32
    %0 = arith.muli %arg0, %c1_i32 : i32
    %1 = arith.addi %0, %arg1 : i32
    %c0_i32 = arith.constant 0 : i32
    %2 = arith.minsi %1, %c0_i32 : i32
    %c0_i32_0 = arith.constant 0 : i32
    %c0_i32_1 = arith.constant 0 : i32
    return %2, %c0_i32_0 : i32, i32
  }
  func.func @transform_1(%arg0: i32, %arg1: i32) -> (i32, i32) {
    %c1_i32 = arith.constant 1 : i32
    %0 = arith.muli %arg0, %c1_i32 : i32
    %1 = arith.addi %0, %arg1 : i32
    %c0_i32 = arith.constant 0 : i32
    %2 = arith.minsi %1, %c0_i32 : i32
    %c0_i32_0 = arith.constant 0 : i32
    %c0_i32_1 = arith.constant 0 : i32
    return %2, %c0_i32_0 : i32, i32
  }
  func.func @transform_2(%arg0: i32, %arg1: i32) -> (i32, i32, i32) {
    %c0_i32 = arith.constant 0 : i32
    %c0_i32_0 = arith.constant 0 : i32
    %c0_i32_1 = arith.constant 0 : i32
    return %arg0, %c0_i32, %c0_i32_0 : i32, i32, i32
  }
}

</mosaic_0001>

<llo_original>
// kernel: tpu_custom_call.1
$region0: #{tpu_custom_call.1}
  #allocation0 [shape = 'u32[]', space=smem, size = 0x4, offset = 0x4, fixed_abs, tag = 'smem constant byte address 0x4 - core index']
  #allocation1 [shape = 'u32[144,128]{1,0:T(1,128)}', space=vmem, size = 0x12000, scoped, tag = 'internal scratch']
  %s0 = inlined_call_operand.hbm [shape: f32[8,128], index: 0, kind: input, shape index: {}]
  %s1 = inlined_call_operand.hbm [shape: f32[8,32], index: 1, kind: input, shape index: {}]
  %s2 = inlined_call_operand.hbm [shape: f32[1,8,32], index: 2, kind: output, shape index: {}]
  %s3 = sld [smem:[#allocation0]]
  $region30: #{tpu_custom_call.1} parent=0
    _
  %s5 = ssub.s32 1, %s3
  %s6 = scalar_select 0, %s5, %s3
  $region1: #{tpu_custom_call.1} parent=0
    #allocation2 [shape = 'u8[4096]{0}', space=vmem, size = 0x1000, scoped, tag = 'input window, operand 0, single buffered']
    #allocation3 [shape = 's32[1]{0}', space=sflag, size = 0x4, scoped, tag = 'scoped memory for tpu_custom_call.1']
    #allocation4 [shape = 's32[1]{0}', space=sflag, size = 0x4, scoped, tag = 'scoped memory for tpu_custom_call.1']
    #allocation5 [shape = 'u8[4096]{0}', space=vmem, size = 0x1000, scoped, tag = 'input window, operand 1, single buffered']
    #allocation6 [shape = 's32[1]{0}', space=sflag, size = 0x4, scoped, tag = 'scoped memory for tpu_custom_call.1']
    #allocation7 [shape = 'u8[4096]{0}', space=vmem, size = 0x1000, scoped, tag = 'output window, operand 0, single buffered']
    %7 = vsyncpa [#allocation3], 0
    %8 = vsyncpa [#allocation6], 0
    %9 = vsyncpa [#allocation4], 0
    // Predicated region
    $region2: #{tpu_custom_call.1} parent=1 // pred_check
      _
    $region3: #{tpu_custom_call.1} parent=1 // pred_check_branch
      %11 = sbr.rel (0) target = $region5
    $region4: #{tpu_custom_call.1} parent=1 // pred_region
      %s12 = sadd.s32 0, 0
      %p13 = scmp.lt.s32.totalorder %s12, 0
      %s14 = scalar_select %p13, %s12, 0
      %s16 = ssub.s32 128, 128
      %17 = vsyncadd [#allocation3], %s16
      %s18 = smul.addr %s14, 128
      %s19 = scalar_lea.hbm %s0, %s18
      %s21 = sshll.u32 [#allocation2], 4
      %s22 = int_to_ptr.vmem [resolvable:$true] %s21
      %24 = dma.hbm_to_vmem [thread:$0]  %s19, 128, %s22, [#allocation3]
    $region5: #{tpu_custom_call.1} parent=1 // pred_fallthru
      _
    // Predicated region
    $region6: #{tpu_custom_call.1} parent=1 // pred_check
      _
    $region7: #{tpu_custom_call.1} parent=1 // pred_check_branch
      %26 = sbr.rel (0) target = $region9
    $region8: #{tpu_custom_call.1} parent=1 // pred_region
      %s27 = sadd.s32 0, 0
      %p28 = scmp.lt.s32.totalorder %s27, 0
      %s29 = scalar_select %p28, %s27, 0
      %s31 = ssub.s32 128, 128
      %32 = vsyncadd [#allocation6], %s31
      %s33 = smul.addr %s29, 128
      %s34 = scalar_lea.hbm %s1, %s33
      %s36 = sshll.u32 [#allocation5], 4
      %s37 = int_to_ptr.vmem [resolvable:$true] %s36
      %39 = dma.hbm_to_vmem [thread:$0]  %s34, 128, %s37, [#allocation6]
    $region9: #{tpu_custom_call.1} parent=1 // pred_fallthru
      _
    // Predicated region
    $region10: #{tpu_custom_call.1} parent=1 // pred_check
      _
    $region11: #{tpu_custom_call.1} parent=1 // pred_check_branch
      %41 = sbr.rel (0) target = $region13
    $region12: #{tpu_custom_call.1} parent=1 // pred_region
      %42 = dma.done [#allocation3], 128
    $region13: #{tpu_custom_call.1} parent=1 // pred_fallthru
      _
    // Predicated region
    $region14: #{tpu_custom_call.1} parent=1 // pred_check
      _
    $region15: #{tpu_custom_call.1} parent=1 // pred_check_branch
      %44 = sbr.rel (0) target = $region17
    $region16: #{tpu_custom_call.1} parent=1 // pred_region
      %45 = dma.done [#allocation6], 128
    $region17: #{tpu_custom_call.1} parent=1 // pred_fallthru
      _
    %s46 = sadd.s32 0, 0
    %p47 = scmp.lt.s32.totalorder %s46, 0
    %s48 = scalar_select %p47, %s46, 0
    %s49 = sadd.s32 0, 0
    %p50 = scmp.lt.s32.totalorder %s49, 0
    %s51 = scalar_select %p50, %s49, 0
    %p52 = scmp.eq.s32.totalorder 0, 0
    // Predicated region
    $region18: #{tpu_custom_call.1} parent=1 // pred_check
      %p53 = pneg %p52
    $region19: #{tpu_custom_call.1} parent=1 // pred_check_branch
      %55 = sbr.rel (%p53) target = $region21
    $region20: #{tpu_custom_call.1} parent=1 // pred_region
      %vm56 = vcmask 261120
      %57 = vst.msk [vmem:[#allocation7] sm:$0xff] %vm56, 0.0
    $region21: #{tpu_custom_call.1} parent=1 // pred_fallthru
      _
    %s58 = sadd.s32 0, 0
    %s59 = smul.u32 %s58, 256
    %v60 = vlaneseq
    %v61 = vshrl.u32 %v60, 7
    %v62 = vadd.s32 %v61, 8
    %v63 = vadd.s32 %v61, 16
    %v64 = vadd.s32 %v61, 24
    %v65 = vadd.s32 %v61, 32
    %v66 = vadd.s32 %v61, 40
    %v67 = vadd.s32 %v61, 48
    %v68 = vadd.s32 %v61, 56
    %v69 = vadd.s32 %v61, 64
    %v70 = vadd.s32 %v61, 72
    %v71 = vadd.s32 %v61, 80
    %v72 = vadd.s32 %v61, 88
    %v73 = vadd.s32 %v61, 96
    %v74 = vadd.s32 %v61, 104
    %v75 = vadd.s32 %v61, 112
    %v76 = vadd.s32 %v61, 120
    %v77 = vlaneseq
    %v78 = vand.u32 %v77, 127
    %vm79 = vcmp.lt.s32.totalorder %v78, 32
    %v80 = vmul.u32 %v78, 4
    %vm81 = vcmp.eq.s32.totalorder %v61, %v80
    %vm82 = vcmp.eq.s32.totalorder %v62, %v80
    %vm83 = vcmp.eq.s32.totalorder %v63, %v80
    %vm84 = vcmp.eq.s32.totalorder %v64, %v80
    %vm85 = vcmp.eq.s32.totalorder %v65, %v80
    %vm86 = vcmp.eq.s32.totalorder %v66, %v80
    %vm87 = vcmp.eq.s32.totalorder %v67, %v80
    %vm88 = vcmp.eq.s32.totalorder %v68, %v80
    %vm89 = vcmp.eq.s32.totalorder %v69, %v80
    %vm90 = vcmp.eq.s32.totalorder %v70, %v80
    %vm91 = vcmp.eq.s32.totalorder %v71, %v80
    %vm92 = vcmp.eq.s32.totalorder %v72, %v80
    %vm93 = vcmp.eq.s32.totalorder %v73, %v80
    %vm94 = vcmp.eq.s32.totalorder %v74, %v80
    %vm95 = vcmp.eq.s32.totalorder %v75, %v80
    %vm96 = vcmp.eq.s32.totalorder %v76, %v80
    %vm97 = vmand %vm79, %vm81
    %vm98 = vmand %vm79, %vm82
    %vm99 = vmand %vm79, %vm83
    %vm100 = vmand %vm79, %vm84
    %vm101 = vmand %vm79, %vm85
    %vm102 = vmand %vm79, %vm86
    %vm103 = vmand %vm79, %vm87
    %vm104 = vmand %vm79, %vm88
    %vm105 = vmand %vm79, %vm89
    %vm106 = vmand %vm79, %vm90
    %vm107 = vmand %vm79, %vm91
    %vm108 = vmand %vm79, %vm92
    %vm109 = vmand %vm79, %vm93
    %vm110 = vmand %vm79, %vm94
    %vm111 = vmand %vm79, %vm95
    %vm112 = vmand %vm79, %vm96
    %vm113 = vcmp.ge.s32.totalorder %v78, 32
    %vm114 = vcmp.lt.s32.totalorder %v78, 64
    %vm115 = vmand %vm113, %vm114
    %v116 = vsub.s32 %v78, 32
    %v117 = vmul.u32 %v116, 4
    %v118 = vadd.s32 %v117, 1
    %vm119 = vcmp.eq.s32.totalorder %v61, %v118
    %vm120 = vcmp.eq.s32.totalorder %v62, %v118
    %vm121 = vcmp.eq.s32.totalorder %v63, %v118
    %vm122 = vcmp.eq.s32.totalorder %v64, %v118
    %vm123 = vcmp.eq.s32.totalorder %v65, %v118
    %vm124 = vcmp.eq.s32.totalorder %v66, %v118
    %vm125 = vcmp.eq.s32.totalorder %v67, %v118
    %vm126 = vcmp.eq.s32.totalorder %v68, %v118
    %vm127 = vcmp.eq.s32.totalorder %v69, %v118
    %vm128 = vcmp.eq.s32.totalorder %v70, %v118
    %vm129 = vcmp.eq.s32.totalorder %v71, %v118
    %vm130 = vcmp.eq.s32.totalorder %v72, %v118
    %vm131 = vcmp.eq.s32.totalorder %v73, %v118
    %vm132 = vcmp.eq.s32.totalorder %v74, %v118
    %vm133 = vcmp.eq.s32.totalorder %v75, %v118
    %vm134 = vcmp.eq.s32.totalorder %v76, %v118
    %vm135 = vmand %vm115, %vm119
    %vm136 = vmand %vm115, %vm120
    %vm137 = vmand %vm115, %vm121
    %vm138 = vmand %vm115, %vm122
    %vm139 = vmand %vm115, %vm123
    %vm140 = vmand %vm115, %vm124
    %vm141 = vmand %vm115, %vm125
    %vm142 = vmand %vm115, %vm126
    %vm143 = vmand %vm115, %vm127
    %vm144 = vmand %vm115, %vm128
    %vm145 = vmand %vm115, %vm129
    %vm146 = vmand %vm115, %vm130
    %vm147 = vmand %vm115, %vm131
    %vm148 = vmand %vm115, %vm132
    %vm149 = vmand %vm115, %vm133
    %vm150 = vmand %vm115, %vm134
    %vm151 = vcmp.ge.s32.totalorder %v78, 64
    %vm152 = vcmp.lt.s32.totalorder %v78, 96
    %vm153 = vmand %vm151, %vm152
    %v154 = vsub.s32 %v78, 64
    %v155 = vmul.u32 %v154, 4
    %v156 = vadd.s32 %v155, 3
    %vm157 = vcmp.eq.s32.totalorder %v61, %v156
    %vm158 = vcmp.eq.s32.totalorder %v62, %v156
    %vm159 = vcmp.eq.s32.totalorder %v63, %v156
    %vm160 = vcmp.eq.s32.totalorder %v64, %v156
    %vm161 = vcmp.eq.s32.totalorder %v65, %v156
    %vm162 = vcmp.eq.s32.totalorder %v66, %v156
    %vm163 = vcmp.eq.s32.totalorder %v67, %v156
    %vm164 = vcmp.eq.s32.totalorder %v68, %v156
    %vm165 = vcmp.eq.s32.totalorder %v69, %v156
    %vm166 = vcmp.eq.s32.totalorder %v70, %v156
    %vm167 = vcmp.eq.s32.totalorder %v71, %v156
    %vm168 = vcmp.eq.s32.totalorder %v72, %v156
    %vm169 = vcmp.eq.s32.totalorder %v73, %v156
    %vm170 = vcmp.eq.s32.totalorder %v74, %v156
    %vm171 = vcmp.eq.s32.totalorder %v75, %v156
    %vm172 = vcmp.eq.s32.totalorder %v76, %v156
    %vm173 = vmand %vm153, %vm157
    %vm174 = vmand %vm153, %vm158
    %vm175 = vmand %vm153, %vm159
    %vm176 = vmand %vm153, %vm160
    %vm177 = vmand %vm153, %vm161
    %vm178 = vmand %vm153, %vm162
    %vm179 = vmand %vm153, %vm163
    %vm180 = vmand %vm153, %vm164
    %vm181 = vmand %vm153, %vm165
    %vm182 = vmand %vm153, %vm166
    %vm183 = vmand %vm153, %vm167
    %vm184 = vmand %vm153, %vm168
    %vm185 = vmand %vm153, %vm169
    %vm186 = vmand %vm153, %vm170
    %vm187 = vmand %vm153, %vm171
    %vm188 = vmand %vm153, %vm172
    %vm189 = vmor %vm97, %vm135
    %vm190 = vmor %vm98, %vm136
    %vm191 = vmor %vm99, %vm137
    %vm192 = vmor %vm100, %vm138
    %vm193 = vmor %vm101, %vm139
    %vm194 = vmor %vm102, %vm140
    %vm195 = vmor %vm103, %vm141
    %vm196 = vmor %vm104, %vm142
    %vm197 = vmor %vm105, %vm143
    %vm198 = vmor %vm106, %vm144
    %vm199 = vmor %vm107, %vm145
    %vm200 = vmor %vm108, %vm146
    %vm201 = vmor %vm109, %vm147
    %vm202 = vmor %vm110, %vm148
    %vm203 = vmor %vm111, %vm149
    %vm204 = vmor %vm112, %vm150
    %vm205 = vmor %vm189, %vm173
    %vm206 = vmor %vm190, %vm174
    %vm207 = vmor %vm191, %vm175
    %vm208 = vmor %vm192, %vm176
    %vm209 = vmor %vm193, %vm177
    %vm210 = vmor %vm194, %vm178
    %vm211 = vmor %vm195, %vm179
    %vm212 = vmor %vm196, %vm180
    %vm213 = vmor %vm197, %vm181
    %vm214 = vmor %vm198, %vm182
    %vm215 = vmor %vm199, %vm183
    %vm216 = vmor %vm200, %vm184
    %vm217 = vmor %vm201, %vm185
    %vm218 = vmor %vm202, %vm186
    %vm219 = vmor %vm203, %vm187
    %vm220 = vmor %vm204, %vm188
    %v221 = vsel %vm205, 1, 0
    %v222 = vsel %vm206, 1, 0
    %v223 = vsel %vm207, 1, 0
    %v224 = vsel %vm208, 1, 0
    %v225 = vsel %vm209, 1, 0
    %v226 = vsel %vm210, 1, 0
    %v227 = vsel %vm211, 1, 0
    %v228 = vsel %vm212, 1, 0
    %v229 = vsel %vm213, 1, 0
    %v230 = vsel %vm214, 1, 0
    %v231 = vsel %vm215, 1, 0
    %v232 = vsel %vm216, 1, 0
    %v233 = vsel %vm217, 1, 0
    %v234 = vsel %vm218, 1, 0
    %v235 = vsel %vm219, 1, 0
    %v236 = vsel %vm220, 1, 0
    %v237 = vcvt.s32.f32 %v221
    %v238 = vcvt.s32.f32 %v222
    %v239 = vcvt.s32.f32 %v223
    %v240 = vcvt.s32.f32 %v224
    %v241 = vcvt.s32.f32 %v225
    %v242 = vcvt.s32.f32 %v226
    %v243 = vcvt.s32.f32 %v227
    %v244 = vcvt.s32.f32 %v228
    %v245 = vcvt.s32.f32 %v229
    %v246 = vcvt.s32.f32 %v230
    %v247 = vcvt.s32.f32 %v231
    %v248 = vcvt.s32.f32 %v232
    %v249 = vcvt.s32.f32 %v233
    %v250 = vcvt.s32.f32 %v234
    %v251 = vcvt.s32.f32 %v235
    %v252 = vcvt.s32.f32 %v236
    %v253 = vld [vmem:[#allocation2] sm:$0xff]
    %v254 = vld [vmem:[#allocation5] sm:$0xff]
    %255 = vmatprep.subr.mxu0 0.0
    %v256 = vand.u32 %v252, 4294901760
    %257 = vmatpush1.msra.mxu0 %v256
    %258 = vmatprep.subr.mxu0 0.0
    %v259 = vand.u32 %v251, 4294901760
    %260 = vmatpush1.msra.mxu0 %v259
    %261 = vmatprep.subr.mxu0 0.0
    %v262 = vand.u32 %v250, 4294901760
    %263 = vmatpush1.msra.mxu0 %v262
    %264 = vmatprep.subr.mxu0 0.0
    %v265 = vand.u32 %v249, 4294901760
    %266 = vmatpush1.msra.mxu0 %v265
    %267 = vmatprep.subr.mxu0 0.0
    %v268 = vand.u32 %v248, 4294901760
    %269 = vmatpush1.msra.mxu0 %v268
    %270 = vmatprep.subr.mxu0 0.0
    %v271 = vand.u32 %v247, 4294901760
    %272 = vmatpush1.msra.mxu0 %v271
    %273 = vmatprep.subr.mxu0 0.0
    %v274 = vand.u32 %v246, 4294901760
    %275 = vmatpush1.msra.mxu0 %v274
    %276 = vmatprep.subr.mxu0 0.0
    %v277 = vand.u32 %v245, 4294901760
    %278 = vmatpush1.msra.mxu0 %v277
    %279 = vmatprep.subr.mxu0 0.0
    %v280 = vand.u32 %v244, 4294901760
    %281 = vmatpush1.msra.mxu0 %v280
    %282 = vmatprep.subr.mxu0 0.0
    %v283 = vand.u32 %v243, 4294901760
    %284 = vmatpush1.msra.mxu0 %v283
    %285 = vmatprep.subr.mxu0 0.0
    %v286 = vand.u32 %v242, 4294901760
    %287 = vmatpush1.msra.mxu0 %v286
    %288 = vmatprep.subr.mxu0 0.0
    %v289 = vand.u32 %v241, 4294901760
    %290 = vmatpush1.msra.mxu0 %v289
    %291 = vmatprep.subr.mxu0 0.0
    %v292 = vand.u32 %v240, 4294901760
    %293 = vmatpush1.msra.mxu0 %v292
    %294 = vmatprep.subr.mxu0 0.0
    %v295 = vand.u32 %v239, 4294901760
    %296 = vmatpush1.msra.mxu0 %v295
    %297 = vmatprep.subr.mxu0 0.0
    %v298 = vand.u32 %v238, 4294901760
    %299 = vmatpush1.msra.mxu0 %v298
    %300 = vmatprep.subr.mxu0 0.0
    %v301 = vand.u32 %v237, 4294901760
    %302 = vmatpush1.msra.mxu0 %v301
    %303 = vmatprep.subr.mxu0 0.0
    %304 = vmatpush2.msra.mxu0 0.0
    %305 = vmatprep.subr.mxu0 0.0
    %306 = vmatpush2.msra.mxu0 0.0
    %307 = vmatprep.subr.mxu0 0.0
    %308 = vmatpush2.msra.mxu0 0.0
    %309 = vmatprep.subr.mxu0 0.0
    %310 = vmatpush2.msra.mxu0 0.0
    %311 = vmatprep.subr.mxu0 0.0
    %312 = vmatpush2.msra.mxu0 0.0
    %313 = vmatprep.subr.mxu0 0.0
    %314 = vmatpush2.msra.mxu0 0.0
    %315 = vmatprep.subr.mxu0 0.0
    %316 = vmatpush2.msra.mxu0 0.0
    %317 = vmatprep.subr.mxu0 0.0
    %318 = vmatpush2.msra.mxu0 0.0
    %319 = vmatprep.subr.mxu0 0.0
    %320 = vmatpush2.msra.mxu0 0.0
    %321 = vmatprep.subr.mxu0 0.0
    %322 = vmatpush2.msra.mxu0 0.0
    %323 = vmatprep.subr.mxu0 0.0
    %324 = vmatpush2.msra.mxu0 0.0
    %325 = vmatprep.subr.mxu0 0.0
    %326 = vmatpush2.msra.mxu0 0.0
    %327 = vmatprep.subr.mxu0 0.0
    %328 = vmatpush2.msra.mxu0 0.0
    %329 = vmatprep.subr.mxu0 0.0
    %330 = vmatpush2.msra.mxu0 0.0
    %331 = vmatprep.subr.mxu0 0.0
    %332 = vmatpush2.msra.mxu0 0.0
    %333 = vmatprep.subr.mxu0 0.0
    %334 = vmatpush2.msra.mxu0 0.0
    %335 = vmatprep.mubr.f32.mxu0 0.0
    %v336 = vand.u32 %v253, 4294901760
    %v337 = vsub.f32 %v253, %v336
    %v338 = vand.u32 %v337, 4294901760
    %v339 = vsub.f32 %v337, %v338
    %v340 = vand.u32 %v339, 4294901760
    %341 = vmatmul.mubr.f32.gmra.mxu0 %v340
    %v342 = vpop.f32.mrf.mxu0
    %v343 = vadd.f32 0.0, %v342
    %v344 = vpop.f32.mrf.mxu0
    %345 = vdwg.mxu0
    %346 = vmatprep.subr.mxu0 0.0
    %v347 = vand.u32 %v252, 4294901760
    %v348 = vsub.f32 %v252, %v347
    %v349 = vand.u32 %v348, 4294901760
    %v350 = vsub.f32 %v348, %v349
    %v351 = vand.u32 %v350, 4294901760
    %352 = vmatpush1.msra.mxu0 %v351
    %353 = vmatprep.subr.mxu0 0.0
    %v354 = vand.u32 %v251, 4294901760
    %v355 = vsub.f32 %v251, %v354
    %v356 = vand.u32 %v355, 4294901760
    %v357 = vsub.f32 %v355, %v356
    %v358 = vand.u32 %v357, 4294901760
    %359 = vmatpush1.msra.mxu0 %v358
    %360 = vmatprep.subr.mxu0 0.0
    %v361 = vand.u32 %v250, 4294901760
    %v362 = vsub.f32 %v250, %v361
    %v363 = vand.u32 %v362, 4294901760
    %v364 = vsub.f32 %v362, %v363
    %v365 = vand.u32 %v364, 4294901760
    %366 = vmatpush1.msra.mxu0 %v365
    %367 = vmatprep.subr.mxu0 0.0
    %v368 = vand.u32 %v249, 4294901760
    %v369 = vsub.f32 %v249, %v368
    %v370 = vand.u32 %v369, 4294901760
    %v371 = vsub.f32 %v369, %v370
    %v372 = vand.u32 %v371, 4294901760
    %373 = vmatpush1.msra.mxu0 %v372
    %374 = vmatprep.subr.mxu0 0.0
    %v375 = vand.u32 %v248, 4294901760
    %v376 = vsub.f32 %v248, %v375
    %v377 = vand.u32 %v376, 4294901760
    %v378 = vsub.f32 %v376, %v377
    %v379 = vand.u32 %v378, 4294901760
    %380 = vmatpush1.msra.mxu0 %v379
    %381 = vmatprep.subr.mxu0 0.0
    %v382 = vand.u32 %v247, 4294901760
    %v383 = vsub.f32 %v247, %v382
    %v384 = vand.u32 %v383, 4294901760
    %v385 = vsub.f32 %v383, %v384
    %v386 = vand.u32 %v385, 4294901760
    %387 = vmatpush1.msra.mxu0 %v386
    %388 = vmatprep.subr.mxu0 0.0
    %v389 = vand.u32 %v246, 4294901760
    %v390 = vsub.f32 %v246, %v389
    %v391 = vand.u32 %v390, 4294901760
    %v392 = vsub.f32 %v390, %v391
    %v393 = vand.u32 %v392, 4294901760
    %394 = vmatpush1.msra.mxu0 %v393
    %395 = vmatprep.subr.mxu0 0.0
    %v396 = vand.u32 %v245, 4294901760
    %v397 = vsub.f32 %v245, %v396
    %v398 = vand.u32 %v397, 4294901760
    %v399 = vsub.f32 %v397, %v398
    %v400 = vand.u32 %v399, 4294901760
    %401 = vmatpush1.msra.mxu0 %v400
    %402 = vmatprep.subr.mxu0 0.0
    %v403 = vand.u32 %v244, 4294901760
    %v404 = vsub.f32 %v244, %v403
    %v405 = vand.u32 %v404, 4294901760
    %v406 = vsub.f32 %v404, %v405
    %v407 = vand.u32 %v406, 4294901760
    %408 = vmatpush1.msra.mxu0 %v407
    %409 = vmatprep.subr.mxu0 0.0
    %v410 = vand.u32 %v243, 4294901760
    %v411 = vsub.f32 %v243, %v410
    %v412 = vand.u32 %v411, 4294901760
    %v413 = vsub.f32 %v411, %v412
    %v414 = vand.u32 %v413, 4294901760
    %415 = vmatpush1.msra.mxu0 %v414
    %416 = vmatprep.subr.mxu0 0.0
    %v417 = vand.u32 %v242, 4294901760
    %v418 = vsub.f32 %v242, %v417
    %v419 = vand.u32 %v418, 4294901760
    %v420 = vsub.f32 %v418, %v419
    %v421 = vand.u32 %v420, 4294901760
    %422 = vmatpush1.msra.mxu0 %v421
    %423 = vmatprep.subr.mxu0 0.0
    %v424 = vand.u32 %v241, 4294901760
    %v425 = vsub.f32 %v241, %v424
    %v426 = vand.u32 %v425, 4294901760
    %v427 = vsub.f32 %v425, %v426
    %v428 = vand.u32 %v427, 4294901760
    %429 = vmatpush1.msra.mxu0 %v428
    %430 = vmatprep.subr.mxu0 0.0
    %v431 = vand.u32 %v240, 4294901760
    %v432 = vsub.f32 %v240, %v431
    %v433 = vand.u32 %v432, 4294901760
    %v434 = vsub.f32 %v432, %v433
    %v435 = vand.u32 %v434, 4294901760
    %436 = vmatpush1.msra.mxu0 %v435
    %437 = vmatprep.subr.mxu0 0.0
    %v438 = vand.u32 %v239, 4294901760
    %v439 = vsub.f32 %v239, %v438
    %v440 = vand.u32 %v439, 4294901760
    %v441 = vsub.f32 %v439, %v440
    %v442 = vand.u32 %v441, 4294901760
    %443 = vmatpush1.msra.mxu0 %v442
    %444 = vmatprep.subr.mxu0 0.0
    %v445 = vand.u32 %v238, 4294901760
    %v446 = vsub.f32 %v238, %v445
    %v447 = vand.u32 %v446, 4294901760
    %v448 = vsub.f32 %v446, %v447
    %v449 = vand.u32 %v448, 4294901760
    %450 = vmatpush1.msra.mxu0 %v449
    %451 = vmatprep.subr.mxu0 0.0
    %v452 = vand.u32 %v237, 4294901760
    %v453 = vsub.f32 %v237, %v452
    %v454 = vand.u32 %v453, 4294901760
    %v455 = vsub.f32 %v453, %v454
    %v456 = vand.u32 %v455, 4294901760
    %457 = vmatpush1.msra.mxu0 %v456
    %458 = vmatprep.subr.mxu0 0.0
    %459 = vmatpush2.msra.mxu0 0.0
    %460 = vmatprep.subr.mxu0 0.0
    %461 = vmatpush2.msra.mxu0 0.0
    %462 = vmatprep.subr.mxu0 0.0
    %463 = vmatpush2.msra.mxu0 0.0
    %464 = vmatprep.subr.mxu0 0.0
    %465 = vmatpush2.msra.mxu0 0.0
    %466 = vmatprep.subr.mxu0 0.0
    %467 = vmatpush2.msra.mxu0 0.0
    %468 = vmatprep.subr.mxu0 0.0
    %469 = vmatpush2.msra.mxu0 0.0
    %470 = vmatprep.subr.mxu0 0.0
    %471 = vmatpush2.msra.mxu0 0.0
    %472 = vmatprep.subr.mxu0 0.0
    %473 = vmatpush2.msra.mxu0 0.0
    %474 = vmatprep.subr.mxu0 0.0
    %475 = vmatpush2.msra.mxu0 0.0
    %476 = vmatprep.subr.mxu0 0.0
    %477 = vmatpush2.msra.mxu0 0.0
    %478 = vmatprep.subr.mxu0 0.0
    %479 = vmatpush2.msra.mxu0 0.0
    %480 = vmatprep.subr.mxu0 0.0
    %481 = vmatpush2.msra.mxu0 0.0
    %482 = vmatprep.subr.mxu0 0.0
    %483 = vmatpush2.msra.mxu0 0.0
    %484 = vmatprep.subr.mxu0 0.0
    %485 = vmatpush2.msra.mxu0 0.0
    %486 = vmatprep.subr.mxu0 0.0
    %487 = vmatpush2.msra.mxu0 0.0
    %488 = vmatprep.subr.mxu0 0.0
    %489 = vmatpush2.msra.mxu0 0.0
    %490 = vmatprep.mubr.f32.mxu0 0.0
    %v491 = vand.u32 %v253, 4294901760
    %492 = vmatmul.mubr.f32.gmra.mxu0 %v491
    %v493 = vpop.f32.mrf.mxu0
    %v494 = vadd.f32 %v343, %v493
    %v495 = vpop.f32.mrf.mxu0
    %496 = vdwg.mxu0
    %497 = vmatprep.subr.mxu0 0.0
    %v498 = vand.u32 %v252, 4294901760
    %v499 = vsub.f32 %v252, %v498
    %500 = vmatpush1.msra.mxu0 %v499
    %501 = vmatprep.subr.mxu0 0.0
    %v502 = vand.u32 %v251, 4294901760
    %v503 = vsub.f32 %v251, %v502
    %504 = vmatpush1.msra.mxu0 %v503
    %505 = vmatprep.subr.mxu0 0.0
    %v506 = vand.u32 %v250, 4294901760
    %v507 = vsub.f32 %v250, %v506
    %508 = vmatpush1.msra.mxu0 %v507
    %509 = vmatprep.subr.mxu0 0.0
    %v510 = vand.u32 %v249, 4294901760
    %v511 = vsub.f32 %v249, %v510
    %512 = vmatpush1.msra.mxu0 %v511
    %513 = vmatprep.subr.mxu0 0.0
    %v514 = vand.u32 %v248, 4294901760
    %v515 = vsub.f32 %v248, %v514
    %516 = vmatpush1.msra.mxu0 %v515
    %517 = vmatprep.subr.mxu0 0.0
    %v518 = vand.u32 %v247, 4294901760
    %v519 = vsub.f32 %v247, %v518
    %520 = vmatpush1.msra.mxu0 %v519
    %521 = vmatprep.subr.mxu0 0.0
    %v522 = vand.u32 %v246, 4294901760
    %v523 = vsub.f32 %v246, %v522
    %524 = vmatpush1.msra.mxu0 %v523
    %525 = vmatprep.subr.mxu0 0.0
    %v526 = vand.u32 %v245, 4294901760
    %v527 = vsub.f32 %v245, %v526
    %528 = vmatpush1.msra.mxu0 %v527
    %529 = vmatprep.subr.mxu0 0.0
    %v530 = vand.u32 %v244, 4294901760
    %v531 = vsub.f32 %v244, %v530
    %532 = vmatpush1.msra.mxu0 %v531
    %533 = vmatprep.subr.mxu0 0.0
    %v534 = vand.u32 %v243, 4294901760
    %v535 = vsub.f32 %v243, %v534
    %536 = vmatpush1.msra.mxu0 %v535
    %537 = vmatprep.subr.mxu0 0.0
    %v538 = vand.u32 %v242, 4294901760
    %v539 = vsub.f32 %v242, %v538
    %540 = vmatpush1.msra.mxu0 %v539
    %541 = vmatprep.subr.mxu0 0.0
    %v542 = vand.u32 %v241, 4294901760
    %v543 = vsub.f32 %v241, %v542
    %544 = vmatpush1.msra.mxu0 %v543
    %545 = vmatprep.subr.mxu0 0.0
    %v546 = vand.u32 %v240, 4294901760
    %v547 = vsub.f32 %v240, %v546
    %548 = vmatpush1.msra.mxu0 %v547
    %549 = vmatprep.subr.mxu0 0.0
    %v550 = vand.u32 %v239, 4294901760
    %v551 = vsub.f32 %v239, %v550
    %552 = vmatpush1.msra.mxu0 %v551
    %553 = vmatprep.subr.mxu0 0.0
    %v554 = vand.u32 %v238, 4294901760
    %v555 = vsub.f32 %v238, %v554
    %556 = vmatpush1.msra.mxu0 %v555
    %557 = vmatprep.subr.mxu0 0.0
    %v558 = vand.u32 %v237, 4294901760
    %v559 = vsub.f32 %v237, %v558
    %560 = vmatpush1.msra.mxu0 %v559
    %561 = vmatprep.subr.mxu0 0.0
    %562 = vmatpush2.msra.mxu0 0.0
    %563 = vmatprep.subr.mxu0 0.0
    %564 = vmatpush2.msra.mxu0 0.0
    %565 = vmatprep.subr.mxu0 0.0
    %566 = vmatpush2.msra.mxu0 0.0
    %567 = vmatprep.subr.mxu0 0.0
    %568 = vmatpush2.msra.mxu0 0.0
    %569 = vmatprep.subr.mxu0 0.0
    %570 = vmatpush2.msra.mxu0 0.0
    %571 = vmatprep.subr.mxu0 0.0
    %572 = vmatpush2.msra.mxu0 0.0
    %573 = vmatprep.subr.mxu0 0.0
    %574 = vmatpush2.msra.mxu0 0.0
    %575 = vmatprep.subr.mxu0 0.0
    %576 = vmatpush2.msra.mxu0 0.0
    %577 = vmatprep.subr.mxu0 0.0
    %578 = vmatpush2.msra.mxu0 0.0
    %579 = vmatprep.subr.mxu0 0.0
    %580 = vmatpush2.msra.mxu0 0.0
    %581 = vmatprep.subr.mxu0 0.0
    %582 = vmatpush2.msra.mxu0 0.0
    %583 = vmatprep.subr.mxu0 0.0
    %584 = vmatpush2.msra.mxu0 0.0
    %585 = vmatprep.subr.mxu0 0.0
    %586 = vmatpush2.msra.mxu0 0.0
    %587 = vmatprep.subr.mxu0 0.0
    %588 = vmatpush2.msra.mxu0 0.0
    %589 = vmatprep.subr.mxu0 0.0
    %590 = vmatpush2.msra.mxu0 0.0
    %591 = vmatprep.subr.mxu0 0.0
    %592 = vmatpush2.msra.mxu0 0.0
    %593 = vmatprep.mubr.f32.mxu0 0.0
    %v594 = vand.u32 %v253, 4294901760
    %v595 = vsub.f32 %v253, %v594
    %596 = vmatmul.mubr.f32.gmra.mxu0 %v595
    %v597 = vpop.f32.mrf.mxu0
    %v598 = vadd.f32 %v494, %v597
    %v599 = vpop.f32.mrf.mxu0
    %600 = vdwg.mxu0
    %601 = vmatprep.subr.mxu0 0.0
    %v602 = vand.u32 %v252, 4294901760
    %603 = vmatpush1.msra.mxu0 %v602
    %604 = vmatprep.subr.mxu0 0.0
    %v605 = vand.u32 %v251, 4294901760
    %606 = vmatpush1.msra.mxu0 %v605
    %607 = vmatprep.subr.mxu0 0.0
    %v608 = vand.u32 %v250, 4294901760
    %609 = vmatpush1.msra.mxu0 %v608
    %610 = vmatprep.subr.mxu0 0.0
    %v611 = vand.u32 %v249, 4294901760
    %612 = vmatpush1.msra.mxu0 %v611
    %613 = vmatprep.subr.mxu0 0.0
    %v614 = vand.u32 %v248, 4294901760
    %615 = vmatpush1.msra.mxu0 %v614
    %616 = vmatprep.subr.mxu0 0.0
    %v617 = vand.u32 %v247, 4294901760
    %618 = vmatpush1.msra.mxu0 %v617
    %619 = vmatprep.subr.mxu0 0.0
    %v620 = vand.u32 %v246, 4294901760
    %621 = vmatpush1.msra.mxu0 %v620
    %622 = vmatprep.subr.mxu0 0.0
    %v623 = vand.u32 %v245, 4294901760
    %624 = vmatpush1.msra.mxu0 %v623
    %625 = vmatprep.subr.mxu0 0.0
    %v626 = vand.u32 %v244, 4294901760
    %627 = vmatpush1.msra.mxu0 %v626
    %628 = vmatprep.subr.mxu0 0.0
    %v629 = vand.u32 %v243, 4294901760
    %630 = vmatpush1.msra.mxu0 %v629
    %631 = vmatprep.subr.mxu0 0.0
    %v632 = vand.u32 %v242, 4294901760
    %633 = vmatpush1.msra.mxu0 %v632
    %634 = vmatprep.subr.mxu0 0.0
    %v635 = vand.u32 %v241, 4294901760
    %636 = vmatpush1.msra.mxu0 %v635
    %637 = vmatprep.subr.mxu0 0.0
    %v638 = vand.u32 %v240, 4294901760
    %639 = vmatpush1.msra.mxu0 %v638
    %640 = vmatprep.subr.mxu0 0.0
    %v641 = vand.u32 %v239, 4294901760
    %642 = vmatpush1.msra.mxu0 %v641
    %643 = vmatprep.subr.mxu0 0.0
    %v644 = vand.u32 %v238, 4294901760
    %645 = vmatpush1.msra.mxu0 %v644
    %646 = vmatprep.subr.mxu0 0.0
    %v647 = vand.u32 %v237, 4294901760
    %648 = vmatpush1.msra.mxu0 %v647
    %649 = vmatprep.subr.mxu0 0.0
    %650 = vmatpush2.msra.mxu0 0.0
    %651 = vmatprep.subr.mxu0 0.0
    %652 = vmatpush2.msra.mxu0 0.0
    %653 = vmatprep.subr.mxu0 0.0
    %654 = vmatpush2.msra.mxu0 0.0
    %655 = vmatprep.subr.mxu0 0.0
    %656 = vmatpush2.msra.mxu0 0.0
    %657 = vmatprep.subr.mxu0 0.0
    %658 = vmatpush2.msra.mxu0 0.0
    %659 = vmatprep.subr.mxu0 0.0
    %660 = vmatpush2.msra.mxu0 0.0
    %661 = vmatprep.subr.mxu0 0.0
    %662 = vmatpush2.msra.mxu0 0.0
    %663 = vmatprep.subr.mxu0 0.0
    %664 = vmatpush2.msra.mxu0 0.0
    %665 = vmatprep.subr.mxu0 0.0
    %666 = vmatpush2.msra.mxu0 0.0
    %667 = vmatprep.subr.mxu0 0.0
    %668 = vmatpush2.msra.mxu0 0.0
    %669 = vmatprep.subr.mxu0 0.0
    %670 = vmatpush2.msra.mxu0 0.0
    %671 = vmatprep.subr.mxu0 0.0
    %672 = vmatpush2.msra.mxu0 0.0
    %673 = vmatprep.subr.mxu0 0.0
    %674 = vmatpush2.msra.mxu0 0.0
    %675 = vmatprep.subr.mxu0 0.0
    %676 = vmatpush2.msra.mxu0 0.0
    %677 = vmatprep.subr.mxu0 0.0
    %678 = vmatpush2.msra.mxu0 0.0
    %679 = vmatprep.subr.mxu0 0.0
    %680 = vmatpush2.msra.mxu0 0.0
    %681 = vmatprep.mubr.f32.mxu0 0.0
    %v682 = vand.u32 %v253, 4294901760
    %v683 = vsub.f32 %v253, %v682
    %v684 = vand.u32 %v683, 4294901760
    %685 = vmatmul.mubr.f32.gmra.mxu0 %v684
    %v686 = vpop.f32.mrf.mxu0
    %v687 = vadd.f32 %v598, %v686
    %v688 = vpop.f32.mrf.mxu0
    %689 = vdwg.mxu0
    %690 = vmatprep.subr.mxu0 0.0
    %v691 = vand.u32 %v252, 4294901760
    %v692 = vsub.f32 %v252, %v691
    %v693 = vand.u32 %v692, 4294901760
    %694 = vmatpush1.msra.mxu0 %v693
    %695 = vmatprep.subr.mxu0 0.0
    %v696 = vand.u32 %v251, 4294901760
    %v697 = vsub.f32 %v251, %v696
    %v698 = vand.u32 %v697, 4294901760
    %699 = vmatpush1.msra.mxu0 %v698
    %700 = vmatprep.subr.mxu0 0.0
    %v701 = vand.u32 %v250, 4294901760
    %v702 = vsub.f32 %v250, %v701
    %v703 = vand.u32 %v702, 4294901760
    %704 = vmatpush1.msra.mxu0 %v703
    %705 = vmatprep.subr.mxu0 0.0
    %v706 = vand.u32 %v249, 4294901760
    %v707 = vsub.f32 %v249, %v706
    %v708 = vand.u32 %v707, 4294901760
    %709 = vmatpush1.msra.mxu0 %v708
    %710 = vmatprep.subr.mxu0 0.0
    %v711 = vand.u32 %v248, 4294901760
    %v712 = vsub.f32 %v248, %v711
    %v713 = vand.u32 %v712, 4294901760
    %714 = vmatpush1.msra.mxu0 %v713
    %715 = vmatprep.subr.mxu0 0.0
    %v716 = vand.u32 %v247, 4294901760
    %v717 = vsub.f32 %v247, %v716
    %v718 = vand.u32 %v717, 4294901760
    %719 = vmatpush1.msra.mxu0 %v718
    %720 = vmatprep.subr.mxu0 0.0
    %v721 = vand.u32 %v246, 4294901760
    %v722 = vsub.f32 %v246, %v721
    %v723 = vand.u32 %v722, 4294901760
    %724 = vmatpush1.msra.mxu0 %v723
    %725 = vmatprep.subr.mxu0 0.0
    %v726 = vand.u32 %v245, 4294901760
    %v727 = vsub.f32 %v245, %v726
    %v728 = vand.u32 %v727, 4294901760
    %729 = vmatpush1.msra.mxu0 %v728
    %730 = vmatprep.subr.mxu0 0.0
    %v731 = vand.u32 %v244, 4294901760
    %v732 = vsub.f32 %v244, %v731
    %v733 = vand.u32 %v732, 4294901760
    %734 = vmatpush1.msra.mxu0 %v733
    %735 = vmatprep.subr.mxu0 0.0
    %v736 = vand.u32 %v243, 4294901760
    %v737 = vsub.f32 %v243, %v736
    %v738 = vand.u32 %v737, 4294901760
    %739 = vmatpush1.msra.mxu0 %v738
    %740 = vmatprep.subr.mxu0 0.0
    %v741 = vand.u32 %v242, 4294901760
    %v742 = vsub.f32 %v242, %v741
    %v743 = vand.u32 %v742, 4294901760
    %744 = vmatpush1.msra.mxu0 %v743
    %745 = vmatprep.subr.mxu0 0.0
    %v746 = vand.u32 %v241, 4294901760
    %v747 = vsub.f32 %v241, %v746
    %v748 = vand.u32 %v747, 4294901760
    %749 = vmatpush1.msra.mxu0 %v748
    %750 = vmatprep.subr.mxu0 0.0
    %v751 = vand.u32 %v240, 4294901760
    %v752 = vsub.f32 %v240, %v751
    %v753 = vand.u32 %v752, 4294901760
    %754 = vmatpush1.msra.mxu0 %v753
    %755 = vmatprep.subr.mxu0 0.0
    %v756 = vand.u32 %v239, 4294901760
    %v757 = vsub.f32 %v239, %v756
    %v758 = vand.u32 %v757, 4294901760
    %759 = vmatpush1.msra.mxu0 %v758
    %760 = vmatprep.subr.mxu0 0.0
    %v761 = vand.u32 %v238, 4294901760
    %v762 = vsub.f32 %v238, %v761
    %v763 = vand.u32 %v762, 4294901760
    %764 = vmatpush1.msra.mxu0 %v763
    %765 = vmatprep.subr.mxu0 0.0
    %v766 = vand.u32 %v237, 4294901760
    %v767 = vsub.f32 %v237, %v766
    %v768 = vand.u32 %v767, 4294901760
    %769 = vmatpush1.msra.mxu0 %v768
    %770 = vmatprep.subr.mxu0 0.0
    %771 = vmatpush2.msra.mxu0 0.0
    %772 = vmatprep.subr.mxu0 0.0
    %773 = vmatpush2.msra.mxu0 0.0
    %774 = vmatprep.subr.mxu0 0.0
    %775 = vmatpush2.msra.mxu0 0.0
    %776 = vmatprep.subr.mxu0 0.0
    %777 = vmatpush2.msra.mxu0 0.0
    %778 = vmatprep.subr.mxu0 0.0
    %779 = vmatpush2.msra.mxu0 0.0
    %780 = vmatprep.subr.mxu0 0.0
    %781 = vmatpush2.msra.mxu0 0.0
    %782 = vmatprep.subr.mxu0 0.0
    %783 = vmatpush2.msra.mxu0 0.0
    %784 = vmatprep.subr.mxu0 0.0
    %785 = vmatpush2.msra.mxu0 0.0
    %786 = vmatprep.subr.mxu0 0.0
    %787 = vmatpush2.msra.mxu0 0.0
    %788 = vmatprep.subr.mxu0 0.0
    %789 = vmatpush2.msra.mxu0 0.0
    %790 = vmatprep.subr.mxu0 0.0
    %791 = vmatpush2.msra.mxu0 0.0
    %792 = vmatprep.subr.mxu0 0.0
    %793 = vmatpush2.msra.mxu0 0.0
    %794 = vmatprep.subr.mxu0 0.0
    %795 = vmatpush2.msra.mxu0 0.0
    %796 = vmatprep.subr.mxu0 0.0
    %797 = vmatpush2.msra.mxu0 0.0
    %798 = vmatprep.subr.mxu0 0.0
    %799 = vmatpush2.msra.mxu0 0.0
    %800 = vmatprep.subr.mxu0 0.0
    %801 = vmatpush2.msra.mxu0 0.0
    %802 = vmatprep.mubr.f32.mxu0 0.0
    %v803 = vand.u32 %v253, 4294901760
    %804 = vmatmul.mubr.f32.gmra.mxu0 %v803
    %v805 = vpop.f32.mrf.mxu0
    %v806 = vadd.f32 %v687, %v805
    %v807 = vpop.f32.mrf.mxu0
    %808 = vdwg.mxu0
    %809 = vmatprep.subr.mxu0 0.0
    %v810 = vand.u32 %v252, 4294901760
    %811 = vmatpush1.msra.mxu0 %v810
    %812 = vmatprep.subr.mxu0 0.0
    %v813 = vand.u32 %v251, 4294901760
    %814 = vmatpush1.msra.mxu0 %v813
    %815 = vmatprep.subr.mxu0 0.0
    %v816 = vand.u32 %v250, 4294901760
    %817 = vmatpush1.msra.mxu0 %v816
    %818 = vmatprep.subr.mxu0 0.0
    %v819 = vand.u32 %v249, 4294901760
    %820 = vmatpush1.msra.mxu0 %v819
    %821 = vmatprep.subr.mxu0 0.0
    %v822 = vand.u32 %v248, 4294901760
    %823 = vmatpush1.msra.mxu0 %v822
    %824 = vmatprep.subr.mxu0 0.0
    %v825 = vand.u32 %v247, 4294901760
    %826 = vmatpush1.msra.mxu0 %v825
    %827 = vmatprep.subr.mxu0 0.0
    %v828 = vand.u32 %v246, 4294901760
    %829 = vmatpush1.msra.mxu0 %v828
    %830 = vmatprep.subr.mxu0 0.0
    %v831 = vand.u32 %v245, 4294901760
    %832 = vmatpush1.msra.mxu0 %v831
    %833 = vmatprep.subr.mxu0 0.0
    %v834 = vand.u32 %v244, 4294901760
    %835 = vmatpush1.msra.mxu0 %v834
    %836 = vmatprep.subr.mxu0 0.0
    %v837 = vand.u32 %v243, 4294901760
    %838 = vmatpush1.msra.mxu0 %v837
    %839 = vmatprep.subr.mxu0 0.0
    %v840 = vand.u32 %v242, 4294901760
    %841 = vmatpush1.msra.mxu0 %v840
    %842 = vmatprep.subr.mxu0 0.0
    %v843 = vand.u32 %v241, 4294901760
    %844 = vmatpush1.msra.mxu0 %v843
    %845 = vmatprep.subr.mxu0 0.0
    %v846 = vand.u32 %v240, 4294901760
    %847 = vmatpush1.msra.mxu0 %v846
    %848 = vmatprep.subr.mxu0 0.0
    %v849 = vand.u32 %v239, 4294901760
    %850 = vmatpush1.msra.mxu0 %v849
    %851 = vmatprep.subr.mxu0 0.0
    %v852 = vand.u32 %v238, 4294901760
    %853 = vmatpush1.msra.mxu0 %v852
    %854 = vmatprep.subr.mxu0 0.0
    %v855 = vand.u32 %v237, 4294901760
    %856 = vmatpush1.msra.mxu0 %v855
    %857 = vmatprep.subr.mxu0 0.0
    %858 = vmatpush2.msra.mxu0 0.0
    %859 = vmatprep.subr.mxu0 0.0
    %860 = vmatpush2.msra.mxu0 0.0
    %861 = vmatprep.subr.mxu0 0.0
    %862 = vmatpush2.msra.mxu0 0.0
    %863 = vmatprep.subr.mxu0 0.0
    %864 = vmatpush2.msra.mxu0 0.0
    %865 = vmatprep.subr.mxu0 0.0
    %866 = vmatpush2.msra.mxu0 0.0
    %867 = vmatprep.subr.mxu0 0.0
    %868 = vmatpush2.msra.mxu0 0.0
    %869 = vmatprep.subr.mxu0 0.0
    %870 = vmatpush2.msra.mxu0 0.0
    %871 = vmatprep.subr.mxu0 0.0
    %872 = vmatpush2.msra.mxu0 0.0
    %873 = vmatprep.subr.mxu0 0.0
    %874 = vmatpush2.msra.mxu0 0.0
    %875 = vmatprep.subr.mxu0 0.0
    %876 = vmatpush2.msra.mxu0 0.0
    %877 = vmatprep.subr.mxu0 0.0
    %878 = vmatpush2.msra.mxu0 0.0
    %879 = vmatprep.subr.mxu0 0.0
    %880 = vmatpush2.msra.mxu0 0.0
    %881 = vmatprep.subr.mxu0 0.0
    %882 = vmatpush2.msra.mxu0 0.0
    %883 = vmatprep.subr.mxu0 0.0
    %884 = vmatpush2.msra.mxu0 0.0
    %885 = vmatprep.subr.mxu0 0.0
    %886 = vmatpush2.msra.mxu0 0.0
    %887 = vmatprep.subr.mxu0 0.0
    %888 = vmatpush2.msra.mxu0 0.0
    %889 = vmatprep.mubr.f32.mxu0 0.0
    %v890 = vand.u32 %v253, 4294901760
    %891 = vmatmul.mubr.f32.gmra.mxu0 %v890
    %v892 = vpop.f32.mrf.mxu0
    %v893 = vadd.f32 %v806, %v892
    %v894 = vpop.f32.mrf.mxu0
    %895 = vdwg.mxu0
    %v896 = vsub.f32 %v893, %v254
    %v897 = vand.u32 2147483647, %v896
    %vm898 = vcmp.le.f32.partialorder %v897, 1.0
    %v899 = vmul.f32 %v896, 0.5
    %v900 = vmul.f32 %v899, %v896
    %v901 = vsub.f32 %v897, 0.5
    %v902 = vsel %vm898, %v900, %v901
    %v903 = vadd.f32 %v893, 1e-09
    %v904 = vrcp.pop %v893
    %906 = vrot.lane.b32.xlu0 %v904, 96
    %v907 = vpop.permute.xlu0 %906
    %v909 = vmul.f32 %v903, %v907
    %v910 = vmul.f32 %v893, 0.01
    %v911 = vadd.f32 %v910, 1.0
    %913 = vrot.lane.b32.xlu0 %v902, 32
    %v914 = vpop.permute.xlu0 %913
    %v916 = vmul.f32 %v911, %v914
    %v917 = vmul.f32 %v916, %v909
    %v918 = vlog2.pop %v909
    %v919 = vmul.f32 %v918, 0.6931472
    %v920 = vsub.f32 %v917, %v919
    %v921 = vstv 0
    %v922 = vadd.s32 %v921, %v61
    %v923 = vmul.u32 %v922, 32
    %v924 = vstv %s59
    %v925 = vadd.s32 %v924, %v923
    %v926 = vadd.s32 %v925, %v78
    %vm927 = vcmp.lt.s32.totalorder %v926, 8
    %929 = vrot.lane.b32.xlu0 %v920, 96
    %v930 = vpop.permute.xlu0 %929
    %v932 = vsel %vm927, %v930, 0.0
    %v933 = vld [vmem:[#allocation7] sm:$0xff]
    %v934 = vadd.f32 %v932, 0.0
    %v935 = vadd.f32 %v933, %v934
    %vm936 = vcmask 261120
    %937 = vst.msk [vmem:[#allocation7] sm:$0xff] %vm936, %v935
    // Predicated region
    $region22: #{tpu_custom_call.1} parent=1 // pred_check
      _
    $region23: #{tpu_custom_call.1} parent=1 // pred_check_branch
      %939 = sbr.rel (0) target = $region25
    $region24: #{tpu_custom_call.1} parent=1 // pred_region
      %s941 = ssub.s32 128, 128
      %942 = vsyncadd [#allocation4], %s941
      %s944 = sshll.u32 [#allocation7], 4
      %s945 = int_to_ptr.vmem [resolvable:$true] %s944
      %947 = dma.vmem_to_hbm [thread:$0]  %s945, 128, %s2, [#allocation4]
    $region25: #{tpu_custom_call.1} parent=1 // pred_fallthru
      _
    // Predicated region
    $region26: #{tpu_custom_call.1} parent=1 // pred_check
      _
    $region27: #{tpu_custom_call.1} parent=1 // pred_check_branch
      %949 = sbr.rel (0) target = $region29
    $region28: #{tpu_custom_call.1} parent=1 // pred_region
      %950 = dma.done [#allocation4], 128
    $region29: #{tpu_custom_call.1} parent=1 // pred_fallthru
      _
    %951 = vsyncpa [#allocation3], 1
    %952 = vsyncpa [#allocation6], 1
    %953 = vsyncpa [#allocation4], 1

</llo_original>
